<compile_context>
chip_gen: v5e
topology: v5e:2x2
jax: 0.10.0
libtpu: 0.0.40
codegen_flags: <defaults>
</compile_context>

<pallas_src>
import math

import jax
import jax.numpy as jnp
from jax.experimental import pallas as pl
from jax.experimental.pallas import tpu as pltpu

_VMEM_LIMIT = 48 * 1024 * 1024   # above default scoped, below v7x physical


# ---------------------------------------------------------------------------
# helpers
# ---------------------------------------------------------------------------
def _round_up(n, m):
    return ((n + m - 1) // m) * m


def _pad_rows(x, n_pad):
    if x.shape[0] == n_pad:
        return x
    return jnp.pad(x, [(0, n_pad - x.shape[0])] + [(0, 0)] * (x.ndim - 1))


def _tile_and_pad(n, want=512):
    """Row tile + padded row count.  Tiles are multiples of 32 (int8/bf16
    sublane packing); gives the 'parallel' axis >=2 steps when n allows so
    v7x's two TensorCores both get work (feedback #6); default tile raised to
    512 for the HBM-roofline win on v5e/v6e (feedback #5)."""
    n32 = _round_up(n, 32)
    if n32 > want:
        return want, _round_up(n, want)
    if n32 >= 64:
        n_pad = _round_up(n, 64)
        return n_pad // 2, n_pad
    return n32, n32


def _src_tile_and_pad(ns, want=512):
    """Src-axis tile for the flash sweep.  When tiling (ns > want) the tile
    must be a multiple of 128 so the (tile_d, tile_s) mask block keeps a
    lane-aligned last dim; otherwise a single full-width src step is used."""
    ns8 = _round_up(ns, 8)
    if ns8 <= want:
        return ns8, ns8
    assert want % 128 == 0
    return want, _round_up(ns, want)


def _fold_relation(w, b, rel, head_scale=None):
    """Fold a per-head (dk,dk) relation transform (and optional per-head scale
    such as relation_pri/sqrt_dk, feedback #1) into an (in, D) linear."""
    h, dk, _ = rel.shape
    d_in = w.shape[0]
    if head_scale is not None:
        rel = rel * head_scale[:, None, None]
    w_f = jnp.einsum("ihd,hdk->ihk", w.reshape(d_in, h, dk), rel)
    b_f = jnp.einsum("hd,hdk->hk", b.reshape(h, dk), rel)
    return w_f.reshape(d_in, h * dk), b_f.reshape(h * dk)


# ---------------------------------------------------------------------------
# pipeline_mode=pl.Buffered(1) for never-refetched blocks (feedback #4).
# Feature-probed once so the script also runs on jax versions without it.
# ---------------------------------------------------------------------------
def _probe_buffered_one():
    def _k(x_ref, w_ref, o_ref):
        o_ref[...] = x_ref[...] + w_ref[...]

    try:
        mode = pl.Buffered(1)
        out = pl.pallas_call(
            _k,
            out_shape=jax.ShapeDtypeStruct((16, 128), jnp.float32),
            grid=(2,),
            in_specs=[
                pl.BlockSpec((8, 128), lambda i: (i, 0)),
                pl.BlockSpec((8, 128), lambda i: (0, 0), pipeline_mode=mode),
            ],
            out_specs=pl.BlockSpec((8, 128), lambda i: (i, 0)),
        )(jnp.ones((16, 128), jnp.float32), jnp.ones((8, 128), jnp.float32))
        jax.block_until_ready(out)
        return mode
    except Exception:
        return None


_BUF1 = _probe_buffered_one()


def _resident(shape, imap):
    """BlockSpec for a block whose index_map is constant: single-buffer it to
    halve its VMEM footprint (matters most on v7x's 64 MiB)."""
    if _BUF1 is not None:
        return pl.BlockSpec(shape, imap, pipeline_mode=_BUF1)
    return pl.BlockSpec(shape, imap)


# ---------------------------------------------------------------------------
# Kernel 1: fused K/V projection (shares the x tile), bf16 in/out, f32 acc.
# ---------------------------------------------------------------------------
def _linear_kv_kernel(x_ref, wk_ref, bk_ref, wv_ref, bv_ref, k_ref, v_ref):
    x = x_ref[...]                                          # (tile, d_in) bf16
    k = jnp.dot(x, wk_ref[...], preferred_element_type=jnp.float32) + bk_ref[...]
    v = jnp.dot(x, wv_ref[...], preferred_element_type=jnp.float32) + bv_ref[...]
    k_ref[...] = k.astype(k_ref.dtype)
    v_ref[...] = v.astype(v_ref.dtype)


def linear_kv(x, wk, bk, wv, bv, tile_m=512):
    n, d_in = x.shape
    d_out = wk.shape[1]
    tile, n_pad = _tile_and_pad(n, tile_m)
    x_p = _pad_rows(x, n_pad)
    k, v = pl.pallas_call(
        _linear_kv_kernel,
        out_shape=(jax.ShapeDtypeStruct((n_pad, d_out), jnp.bfloat16),
                   jax.ShapeDtypeStruct((n_pad, d_out), jnp.bfloat16)),
        grid=(n_pad // tile,),
        in_specs=[
            pl.BlockSpec((tile, d_in), lambda i: (i, 0)),
            _resident((d_in, d_out), lambda i: (0, 0)),
            _resident((1, d_out), lambda i: (0, 0)),
            _resident((d_in, d_out), lambda i: (0, 0)),
            _resident((1, d_out), lambda i: (0, 0)),
        ],
        out_specs=(pl.BlockSpec((tile, d_out), lambda i: (i, 0)),
                   pl.BlockSpec((tile, d_out), lambda i: (i, 0))),
        compiler_params=pltpu.CompilerParams(
            dimension_semantics=("parallel",),
            vmem_limit_bytes=_VMEM_LIMIT),
    )(x_p, wk, bk.reshape(1, d_out), wv, bv.reshape(1, d_out))
    return k[:n], v[:n]


# ---------------------------------------------------------------------------
# Kernel 2: lf + hf attention + aggregation, lane-dense (N, H*dk) layout,
# flash-style sweep over src tiles (grid axis 1, "arbitrary"), fused Q proj.
# ---------------------------------------------------------------------------
def attn_agg(h_dst, wq, bq, k, v, mask, n_heads, d_k,
             dst_tile=512, src_tile=512):
    nd, d_in = h_dst.shape
    ns, d = k.shape
    tile_d, nd_pad = _tile_and_pad(nd, dst_tile)
    tile_s, ns_pad = _src_tile_and_pad(ns, src_tile)
    h_p = _pad_rows(h_dst, nd_pad)
    k_p = _pad_rows(k, ns_pad)
    v_p = _pad_rows(v, ns_pad)
    mask_p = jnp.pad(mask, ((0, nd_pad - nd), (0, ns_pad - ns)))

    def kernel(hd_ref, wq_ref, bq_ref, k_ref, v_ref, msk_ref, lt_ref, ht_ref,
               q_scr, mlf, llf, alf, mhf, lhf, ahf):
        j = pl.program_id(1)
        neg = jnp.float32(-1e30)

        @pl.when(j == 0)
        def _init():
            # fused Q projection (feedback #8): once per dst tile, into VMEM.
            q = (jnp.dot(hd_ref[...], wq_ref[...],
                         preferred_element_type=jnp.float32) + bq_ref[...])
            q_scr[...] = q.astype(jnp.bfloat16)
            mlf[...] = jnp.full_like(mlf, -1e30)
            mhf[...] = jnp.full_like(mhf, -1e30)
            llf[...] = jnp.zeros_like(llf)
            lhf[...] = jnp.zeros_like(lhf)
            alf[...] = jnp.zeros_like(alf)
            ahf[...] = jnp.zeros_like(ahf)

        q_all = q_scr[...]                          # (tile_d, D) bf16
        k_all = k_ref[...]                          # (tile_s, D) bf16
        v_all = v_ref[...].astype(jnp.float32)      # f32 for the P@V dots
        on_edge = msk_ref[...] > 0                  # (tile_d, tile_s) bool

        m_lf_p = mlf[...]
        l_lf_p = llf[...]
        a_lf_p = alf[...]
        m_hf_p = mhf[...]
        l_hf_p = lhf[...]
        a_hf_p = ahf[...]

        def _online(logits, m_prev, l_prev, a_prev, vh):
            mn = jnp.maximum(m_prev, jnp.max(logits, axis=-1, keepdims=True))
            corr = jnp.exp(m_prev - mn)
            p = jnp.exp(logits - mn)
            ln = corr * l_prev + jnp.sum(p, axis=-1, keepdims=True)
            an = corr * a_prev + jnp.dot(p, vh,
                                         preferred_element_type=jnp.float32)
            return mn, ln, an

        m_lf_n, l_lf_n, a_lf_n = [], [], []
        m_hf_n, l_hf_n, a_hf_n = [], [], []
        for hh in range(n_heads):                   # static unroll over heads
            lo = hh * d_k
            qh = q_all[:, lo:lo + d_k]
            kh = k_all[:, lo:lo + d_k]
            vh = v_all[:, lo:lo + d_k]
            # bf16 MXU matmul, f32 acc; relation_pri/sqrt_dk already in Wk.
            score = jax.lax.dot_general(
                qh, kh, (((1,), (1,)), ((), ())),
                preferred_element_type=jnp.float32)          # (tile_d, tile_s)
            lf = jnp.where(on_edge, score, neg)
            # exact (not approx) reciprocal: the hf logits can be very large
            # and the reference numerics depend on them; masked entries drop.
            hf = jnp.where(on_edge, 1.0 / (score + 1e-6), neg)

            mn, ln, an = _online(lf, m_lf_p[:, hh:hh + 1],
                                 l_lf_p[:, hh:hh + 1], a_lf_p[:, lo:lo + d_k],
                                 vh)
            m_lf_n.append(mn); l_lf_n.append(ln); a_lf_n.append(an)
            mn, ln, an = _online(hf, m_hf_p[:, hh:hh + 1],
                                 l_hf_p[:, hh:hh + 1], a_hf_p[:, lo:lo + d_k],
                                 vh)
            m_hf_n.append(mn); l_hf_n.append(ln); a_hf_n.append(an)

        # one lane-dense store per scratch per src step (feedback #7)
        mlf[...] = jnp.concatenate(m_lf_n, axis=-1)
        llf[...] = jnp.concatenate(l_lf_n, axis=-1)
        alf[...] = jnp.concatenate(a_lf_n, axis=-1)
        mhf[...] = jnp.concatenate(m_hf_n, axis=-1)
        lhf[...] = jnp.concatenate(l_hf_n, axis=-1)
        ahf[...] = jnp.concatenate(a_hf_n, axis=-1)

        @pl.when(j == pl.num_programs(1) - 1)
        def _finalize():
            acc_l, lsum_l = alf[...], llf[...]
            acc_h, lsum_h = ahf[...], lhf[...]
            lt_parts = [acc_l[:, hh * d_k:(hh + 1) * d_k]
                        * pl.reciprocal(lsum_l[:, hh:hh + 1], approx=True)
                        for hh in range(n_heads)]
            ht_parts = [acc_h[:, hh * d_k:(hh + 1) * d_k]
                        * pl.reciprocal(lsum_h[:, hh:hh + 1], approx=True)
                        for hh in range(n_heads)]
            lt_ref[...] = jnp.concatenate(lt_parts, axis=-1).astype(jnp.bfloat16)
            ht_ref[...] = jnp.concatenate(ht_parts, axis=-1).astype(jnp.bfloat16)

    lt, ht = pl.pallas_call(
        kernel,
        out_shape=(jax.ShapeDtypeStruct((nd_pad, d), jnp.bfloat16),
                   jax.ShapeDtypeStruct((nd_pad, d), jnp.bfloat16)),
        grid=(nd_pad // tile_d, ns_pad // tile_s),
        in_specs=[
            pl.BlockSpec((tile_d, d_in), lambda i, j: (i, 0)),
            _resident((d_in, d), lambda i, j: (0, 0)),
            _resident((1, d), lambda i, j: (0, 0)),
            pl.BlockSpec((tile_s, d), lambda i, j: (j, 0)),
            pl.BlockSpec((tile_s, d), lambda i, j: (j, 0)),
            pl.BlockSpec((tile_d, tile_s), lambda i, j: (i, j)),
        ],
        out_specs=(pl.BlockSpec((tile_d, d), lambda i, j: (i, 0)),
                   pl.BlockSpec((tile_d, d), lambda i, j: (i, 0))),
        scratch_shapes=[
            pltpu.VMEM((tile_d, d), jnp.bfloat16),          # fused q
            pltpu.VMEM((tile_d, n_heads), jnp.float32),     # m_lf
            pltpu.VMEM((tile_d, n_heads), jnp.float32),     # l_lf
            pltpu.VMEM((tile_d, d), jnp.float32),           # acc_lf
            pltpu.VMEM((tile_d, n_heads), jnp.float32),     # m_hf
            pltpu.VMEM((tile_d, n_heads), jnp.float32),     # l_hf
            pltpu.VMEM((tile_d, d), jnp.float32),           # acc_hf
        ],
        compiler_params=pltpu.CompilerParams(
            dimension_semantics=("parallel", "arbitrary"),
            vmem_limit_bytes=_VMEM_LIMIT),
    )(h_p, wq, bq.reshape(1, d), k_p, v_p, mask_p)
    return lt[:nd], ht[:nd]


# ---------------------------------------------------------------------------
# Kernel 3: ori_v projection + ComponentAttention + a_linear + skip residual.
# The (N,2) score output is dropped (unused in the mergin=False path).
# ---------------------------------------------------------------------------
def comp_combine(lt, ht, hin, wv, bv, wf, b_f, wx, bx, wa, ba, alpha,
                 tile_m=512):
    n, d = lt.shape
    d_in = hin.shape[1]
    tile, n_pad = _tile_and_pad(n, tile_m)

    def kernel(alpha_ref, lt_ref, ht_ref, hin_ref, wv_ref, bv_ref,
               wf_ref, bf_ref, wx_ref, bx_ref, wa_ref, ba_ref, out_ref):
        hin_f = hin_ref[...]
        # fused ori_v projection (feedback #8)
        ov = (jnp.dot(hin_f.astype(jnp.bfloat16), wv_ref[...],
                      preferred_element_type=jnp.float32) + bv_ref[...])
        lt_v = ov + lt_ref[...]
        ht_v = ov - ht_ref[...]

        z = jnp.concatenate([lt_v, ht_v], axis=0).astype(jnp.bfloat16)
        hz = jnp.tanh(jnp.dot(z, wf_ref[...],
                              preferred_element_type=jnp.float32) + bf_ref[...])
        xp = jnp.tanh(jnp.dot(ov.astype(jnp.bfloat16), wx_ref[...],
                              preferred_element_type=jnp.float32) + bx_ref[...])

        l0 = jnp.sum(hz[:tile] * xp, axis=-1, keepdims=True)
        l1 = jnp.sum(hz[tile:] * xp, axis=-1, keepdims=True)
        mx = jnp.maximum(l0, l1)
        e0 = jnp.exp(l0 - mx)
        e1 = jnp.exp(l1 - mx)
        inv = pl.reciprocal(e0 + e1, approx=True)
        t = lt_v * (e0 * inv) + ht_v * (e1 * inv)

        # TODO(synk): nn.Dropout(p=0.2) treated as identity (eval mode).
        trans = (jnp.dot(t.astype(jnp.bfloat16), wa_ref[...],
                         preferred_element_type=jnp.float32) + ba_ref[...])
        a = alpha_ref[0]
        out_ref[...] = trans * a + hin_f * (1.0 - a)

    out = pl.pallas_call(
        kernel,
        out_shape=jax.ShapeDtypeStruct((n_pad, d), jnp.float32),
        grid=(n_pad // tile,),
        in_specs=[
            pl.BlockSpec(memory_space=pltpu.MemorySpace.SMEM),   # alpha (1,)
            pl.BlockSpec((tile, d), lambda i: (i, 0)),
            pl.BlockSpec((tile, d), lambda i: (i, 0)),
            pl.BlockSpec((tile, d_in), lambda i: (i, 0)),
            _resident((d_in, d), lambda i: (0, 0)),
            _resident((1, d), lambda i: (0, 0)),
            _resident((d, d), lambda i: (0, 0)),
            _resident((1, d), lambda i: (0, 0)),
            _resident((d, d), lambda i: (0, 0)),
            _resident((1, d), lambda i: (0, 0)),
            _resident((d, d), lambda i: (0, 0)),
            _resident((1, d), lambda i: (0, 0)),
        ],
        out_specs=pl.BlockSpec((tile, d), lambda i: (i, 0)),
        compiler_params=pltpu.CompilerParams(
            dimension_semantics=("parallel",),
            vmem_limit_bytes=_VMEM_LIMIT),
    )(jnp.reshape(alpha, (1,)).astype(jnp.float32),
      _pad_rows(lt, n_pad), _pad_rows(ht, n_pad), _pad_rows(hin, n_pad),
      wv, bv.reshape(1, d), wf, b_f.reshape(1, d), wx, bx.reshape(1, d),
      wa, ba.reshape(1, d))
    return out[:n]


# ---------------------------------------------------------------------------
# HLayer forward (mergin=False path; merge_loss = None).
# ---------------------------------------------------------------------------
def hlayer_forward(params, h, graph, attn_src_tile=512):
    node_dict = graph["node_dict"]
    edge_dict = graph["edge_dict"]
    H = params["n_heads"]
    dk = params["d_k"]
    sqrt_dk = math.sqrt(dk)
    bf16 = jnp.bfloat16

    h_bf = {nt: h[nt].astype(bf16) for nt in h}
    lt_acc = {nt: [] for nt in node_dict}
    ht_acc = {nt: [] for nt in node_dict}

    # --- HATT (lf & hf) + relation_msg message passing, per etype ---
    # TODO(synk): etypes sharing a src type could batch their folded K/V
    # weights into one wider matmul (feedback #9); not needed for this graph.
    for (src, etype, dst) in graph["canonical_etypes"]:
        s_id, d_id, e_id = node_dict[src], node_dict[dst], edge_dict[etype]

        pri = params["relation_pri"][e_id] / sqrt_dk
        wk_f, bk_f = _fold_relation(params["w_k"][s_id], params["b_k"][s_id],
                                    params["relation_att"][e_id],
                                    head_scale=pri)
        wv_f, bv_f = _fold_relation(params["w_v"][s_id], params["b_v"][s_id],
                                    params["relation_msg"][e_id])

        k_t, v_t = linear_kv(h_bf[src], wk_f.astype(bf16), bk_f,
                             wv_f.astype(bf16), bv_f)            # (Ns, D) bf16

        lt_agg, ht_agg = attn_agg(h_bf[dst], params["w_q"][d_id].astype(bf16),
                                  params["b_q"][d_id], k_t, v_t,
                                  graph["masks"][etype], H, dk,
                                  src_tile=attn_src_tile)
        lt_acc[dst].append(lt_agg)
        ht_acc[dst].append(ht_agg)

    # --- per node type: cross_reducer='mean', component attention, residual ---
    new_h = {}
    for ntype, n_id in node_dict.items():
        cnt = float(len(lt_acc[ntype]))
        lt = sum(a.astype(jnp.float32) for a in lt_acc[ntype]) / cnt
        ht = sum(a.astype(jnp.float32) for a in ht_acc[ntype]) / cnt
        alpha = jax.nn.sigmoid(params["skip"][n_id])
        new_h[ntype] = comp_combine(
            lt, ht, h[ntype],
            params["w_v"][n_id].astype(bf16), params["b_v"][n_id],
            params["w_f"].astype(bf16), params["b_f"],
            params["w_x"].astype(bf16), params["b_x"],
            params["w_a"][n_id].astype(bf16), params["b_a"][n_id], alpha)

    # TODO(synk): merge_loss (train_mask/env_label/zeta margin loss) only
    # exists for mergin=True + out_key; the mergin=False path returns None.
    return new_h, None


# ---------------------------------------------------------------------------
# Pure-JAX reference of the same math under the same bf16 storage policy
# (identical rounding points, f32 accumulation) -> validates kernel lowering.
# ---------------------------------------------------------------------------
def hlayer_forward_ref(params, h, graph):
    f32 = jnp.float32
    bf = lambda x: x.astype(jnp.bfloat16).astype(f32)
    node_dict = graph["node_dict"]
    edge_dict = graph["edge_dict"]
    H, dk, D = params["n_heads"], params["d_k"], params["out_dim"]
    sqrt_dk = math.sqrt(dk)
    lt_acc = {nt: [] for nt in node_dict}
    ht_acc = {nt: [] for nt in node_dict}
    for (src, etype, dst) in graph["canonical_etypes"]:
        s, d, e = node_dict[src], node_dict[dst], edge_dict[etype]
        pri = params["relation_pri"][e] / sqrt_dk
        wk_f, bk_f = _fold_relation(params["w_k"][s], params["b_k"][s],
                                    params["relation_att"][e], head_scale=pri)
        wv_f, bv_f = _fold_relation(params["w_v"][s], params["b_v"][s],
                                    params["relation_msg"][e])
        k = bf(bf(h[src]) @ bf(wk_f) + bk_f).reshape(-1, H, dk)
        v = bf(bf(h[src]) @ bf(wv_f) + bv_f).reshape(-1, H, dk)
        q = bf(bf(h[dst]) @ bf(params["w_q"][d])
               + params["b_q"][d]).reshape(-1, H, dk)
        score = jnp.einsum("dhk,shk->dsh", q, k)     # pri/sqrt_dk folded in Wk
        mask = (graph["masks"][etype] > 0)[:, :, None]
        lf = jnp.where(mask, score, -1e30)
        hf = jnp.where(mask, 1.0 / (score + 1e-6), -1e30)
        a_lf = jax.nn.softmax(lf, axis=1)
        a_hf = jax.nn.softmax(hf, axis=1)
        lt_acc[dst].append(bf(jnp.einsum("dsh,shk->dhk", a_lf, v).reshape(-1, D)))
        ht_acc[dst].append(bf(jnp.einsum("dsh,shk->dhk", a_hf, v).reshape(-1, D)))
    new_h = {}
    for nt, n_id in node_dict.items():
        cnt = float(len(lt_acc[nt]))
        lt = sum(lt_acc[nt]) / cnt
        ht = sum(ht_acc[nt]) / cnt
        ov = bf(h[nt]) @ bf(params["w_v"][n_id]) + params["b_v"][n_id]
        lt = ov + lt
        ht = ov - ht
        hz_l = jnp.tanh(bf(lt) @ bf(params["w_f"]) + params["b_f"])
        hz_h = jnp.tanh(bf(ht) @ bf(params["w_f"]) + params["b_f"])
        xp = jnp.tanh(bf(ov) @ bf(params["w_x"]) + params["b_x"])
        l0 = jnp.sum(hz_l * xp, axis=-1, keepdims=True)
        l1 = jnp.sum(hz_h * xp, axis=-1, keepdims=True)
        s01 = jax.nn.softmax(jnp.concatenate([l0, l1], axis=-1), axis=-1)
        t = lt * s01[:, 0:1] + ht * s01[:, 1:2]
        trans = bf(t) @ bf(params["w_a"][n_id]) + params["b_a"][n_id]
        alpha = jax.nn.sigmoid(params["skip"][n_id])
        new_h[nt] = trans * alpha + h[nt] * (1.0 - alpha)
    return new_h


# ---------------------------------------------------------------------------
# Deterministic parameter init (matches __init__ shapes).
# ---------------------------------------------------------------------------
def init_params(key, in_dim, out_dim, n_heads, num_types, num_relations):
    d_k = out_dim // n_heads
    ks = iter(jax.random.split(key, 32))

    def lin_stack(n, di, do):
        bound = 1.0 / math.sqrt(di)
        w = jax.random.uniform(next(ks), (n, di, do), jnp.float32, -bound, bound)
        b = jax.random.uniform(next(ks), (n, do), jnp.float32, -bound, bound)
        return w, b

    w_k, b_k = lin_stack(num_types, in_dim, out_dim)
    w_q, b_q = lin_stack(num_types, in_dim, out_dim)
    w_v, b_v = lin_stack(num_types, in_dim, out_dim)
    w_a, b_a = lin_stack(num_types, out_dim, out_dim)
    w_f, b_f = lin_stack(1, out_dim, out_dim)   # ComponentAttention W_f
    w_x, b_x = lin_stack(1, out_dim, out_dim)   # ComponentAttention W_x

    def xavier(k, shape):
        limit = math.sqrt(6.0 / (shape[-2] + shape[-1]))
        return jax.random.uniform(k, shape, jnp.float32, -limit, limit)

    return dict(
        n_heads=n_heads, d_k=d_k, out_dim=out_dim,
        w_k=w_k, b_k=b_k, w_q=w_q, b_q=b_q, w_v=w_v, b_v=b_v,
        w_a=w_a, b_a=b_a,
        w_f=w_f[0], b_f=b_f[0], w_x=w_x[0], b_x=b_x[0],
        relation_att=xavier(next(ks), (num_relations, n_heads, d_k, d_k)),
        relation_msg=xavier(next(ks), (num_relations, n_heads, d_k, d_k)),
        relation_pri=jnp.ones((num_relations, n_heads), jnp.float32),
        skip=jnp.ones((num_types,), jnp.float32),
    )


if __name__ == "__main__":
    key = jax.random.PRNGKey(0)
    in_dim = out_dim = 32
    n_heads = 4

    node_dict = {"user": 0, "item": 1}
    edge_dict = {"rates": 0, "rated_by": 1}
    canonical_etypes = [("user", "rates", "item"), ("item", "rated_by", "user")]
    n_nodes = {"user": 160, "item": 128}

    kp, ku, ki, km1, km2 = jax.random.split(key, 5)
    params = init_params(kp, in_dim, out_dim, n_heads,
                         len(node_dict), len(edge_dict))
    h = {
        "user": jax.random.normal(ku, (n_nodes["user"], in_dim), jnp.float32),
        "item": jax.random.normal(ki, (n_nodes["item"], in_dim), jnp.float32),
    }

    # Random bipartite heterograph; mask layout is (N_dst, N_src), int8.
    # Every dst row is kept non-empty (as in a connected DGL graph).
    def rand_mask(k_, nd_, ns_):
        m = jax.random.uniform(k_, (nd_, ns_)) < 0.25
        cols = jnp.arange(nd_) * ns_ // nd_
        m = m.at[jnp.arange(nd_), cols].set(True)
        return m.astype(jnp.int8)

    masks = {
        "rates": rand_mask(km1, n_nodes["item"], n_nodes["user"]),
        "rated_by": rand_mask(km2, n_nodes["user"], n_nodes["item"]),
    }
    graph = dict(node_dict=node_dict, edge_dict=edge_dict,
                 canonical_etypes=canonical_etypes, masks=masks)

    # src_tile=128 so the demo exercises the multi-step flash sweep on the
    # 160-src etype while the 128-src etype takes the single-tile path.
    new_h, merge_loss = hlayer_forward(params, h, graph, attn_src_tile=128)
    jax.block_until_ready(new_h)

    with jax.default_matmul_precision("highest"):
        ref_h = hlayer_forward_ref(params, h, graph)

    for nt in node_dict:
        assert new_h[nt].shape == (n_nodes[nt], out_dim)
        assert bool(jnp.all(jnp.isfinite(new_h[nt])))
        err = float(jnp.max(jnp.abs(new_h[nt] - ref_h[nt])))
        assert jnp.allclose(new_h[nt], ref_h[nt], atol=2e-2, rtol=2e-2), (nt, err)
    assert merge_loss is None

    print("KERNEL_OK")
</pallas_src>

<mosaic_0001>
module attributes {stable_mosaic.version = 11 : i64} {
  func.func @_k(%arg0: i32, %arg1: memref<8x128xf32, #tpu.memory_space<vmem>>, %arg2: memref<8x128xf32, #tpu.memory_space<vmem>>, %arg3: memref<8x128xf32, #tpu.memory_space<vmem>>) attributes {dimension_semantics = [#tpu.dimension_semantics<arbitrary>], iteration_bounds = array<i64: 2>, scalar_prefetch = 0 : i64, scratch_operands = 0 : i64, tpu.core_type = #tpu.core_type<tc>, window_params = [{transform_indices = @transform_0, window_bounds = array<i64: 8, 128>}, {pipeline_mode = #tpu.pipeline_mode<synchronous>, transform_indices = @transform_1, window_bounds = array<i64: 8, 128>}, {transform_indices = @transform_2, window_bounds = array<i64: 8, 128>}]} {
    %c0 = arith.constant 0 : index
    %c0_0 = arith.constant 0 : index
    %0 = vector.load %arg1[%c0, %c0_0] : memref<8x128xf32, #tpu.memory_space<vmem>>, vector<8x128xf32>
    %c0_1 = arith.constant 0 : index
    %c0_2 = arith.constant 0 : index
    %1 = vector.load %arg2[%c0_1, %c0_2] : memref<8x128xf32, #tpu.memory_space<vmem>>, vector<8x128xf32>
    %2 = arith.addf %0, %1 : vector<8x128xf32>
    %c0_3 = arith.constant 0 : index
    %c0_4 = arith.constant 0 : index
    %3 = vector.load %arg3[%c0_3, %c0_4] : memref<8x128xf32, #tpu.memory_space<vmem>>, vector<8x128xf32>
    tpu.vector_store %arg3[%c0_3, %c0_4], %2 {strides = array<i32>} : memref<8x128xf32, #tpu.memory_space<vmem>>, vector<8x128xf32>,
    return
  }
  func.func @transform_0(%arg0: i32) -> (i32, i32) {
    %c0_i32 = arith.constant 0 : i32
    %c0_i32_0 = arith.constant 0 : i32
    return %arg0, %c0_i32 : i32, i32
  }
  func.func @transform_1(%arg0: i32) -> (i32, i32) {
    %c0_i32 = arith.constant 0 : i32
    %c0_i32_0 = arith.constant 0 : i32
    %c0_i32_1 = arith.constant 0 : i32
    return %c0_i32, %c0_i32_0 : i32, i32
  }
  func.func @transform_2(%arg0: i32) -> (i32, i32) {
    %c0_i32 = arith.constant 0 : i32
    %c0_i32_0 = arith.constant 0 : i32
    return %arg0, %c0_i32 : i32, i32
  }
}

module attributes {stable_mosaic.version = 11 : i64} {
  func.func @_linear_kv_kernel(%arg0: i32, %arg1: memref<96x32xbf16, #tpu.memory_space<vmem>>, %arg2: memref<32x32xbf16, #tpu.memory_space<vmem>>, %arg3: memref<1x32xf32, #tpu.memory_space<vmem>>, %arg4: memref<32x32xbf16, #tpu.memory_space<vmem>>, %arg5: memref<1x32xf32, #tpu.memory_space<vmem>>, %arg6: memref<96x32xbf16, #tpu.memory_space<vmem>>, %arg7: memref<96x32xbf16, #tpu.memory_space<vmem>>) attributes {dimension_semantics = [#tpu.dimension_semantics<parallel>], iteration_bounds = array<i64: 2>, scalar_prefetch = 0 : i64, scratch_operands = 0 : i64, tpu.core_type = #tpu.core_type<tc>, window_params = [{transform_indices = @transform_0, window_bounds = array<i64: 96, 32>}, {pipeline_mode = #tpu.pipeline_mode<synchronous>, transform_indices = @transform_1, window_bounds = array<i64: 32, 32>}, {pipeline_mode = #tpu.pipeline_mode<synchronous>, transform_indices = @transform_2, window_bounds = array<i64: 1, 32>}, {pipeline_mode = #tpu.pipeline_mode<synchronous>, transform_indices = @transform_3, window_bounds = array<i64: 32, 32>}, {pipeline_mode = #tpu.pipeline_mode<synchronous>, transform_indices = @transform_4, window_bounds = array<i64: 1, 32>}, {transform_indices = @transform_5, window_bounds = array<i64: 96, 32>}, {transform_indices = @transform_6, window_bounds = array<i64: 96, 32>}]} {
    %c0 = arith.constant 0 : index
    %c0_0 = arith.constant 0 : index
    %0 = vector.load %arg1[%c0, %c0_0] : memref<96x32xbf16, #tpu.memory_space<vmem>>, vector<96x32xbf16>
    %c0_1 = arith.constant 0 : index
    %c0_2 = arith.constant 0 : index
    %1 = vector.load %arg2[%c0_1, %c0_2] : memref<32x32xbf16, #tpu.memory_space<vmem>>, vector<32x32xbf16>
    %cst = arith.constant dense<0.000000e+00> : vector<96x32xf32>
    %2 = tpu.matmul %0, %1, %cst {dimension_numbers = #tpu.dot_dimension_numbers<[1], [0], [0], [1], [0, 0, 1, 1], [], []>} : vector<96x32xbf16>, vector<32x32xbf16>, vector<96x32xf32> -> vector<96x32xf32>
    %c0_3 = arith.constant 0 : index
    %c0_4 = arith.constant 0 : index
    %3 = vector.load %arg3[%c0_3, %c0_4] : memref<1x32xf32, #tpu.memory_space<vmem>>, vector<1x32xf32>
    %4 = vector.broadcast %3 : vector<1x32xf32> to vector<96x32xf32>
    %5 = arith.addf %2, %4 : vector<96x32xf32>
    %c0_5 = arith.constant 0 : index
    %c0_6 = arith.constant 0 : index
    %6 = vector.load %arg4[%c0_5, %c0_6] : memref<32x32xbf16, #tpu.memory_space<vmem>>, vector<32x32xbf16>
    %cst_7 = arith.constant dense<0.000000e+00> : vector<96x32xf32>
    %7 = tpu.matmul %0, %6, %cst_7 {dimension_numbers = #tpu.dot_dimension_numbers<[1], [0], [0], [1], [0, 0, 1, 1], [], []>} : vector<96x32xbf16>, vector<32x32xbf16>, vector<96x32xf32> -> vector<96x32xf32>
    %c0_8 = arith.constant 0 : index
    %c0_9 = arith.constant 0 : index
    %8 = vector.load %arg5[%c0_8, %c0_9] : memref<1x32xf32, #tpu.memory_space<vmem>>, vector<1x32xf32>
    %9 = vector.broadcast %8 : vector<1x32xf32> to vector<96x32xf32>
    %10 = arith.addf %7, %9 : vector<96x32xf32>
    %11 = arith.truncf %5 : vector<96x32xf32> to vector<96x32xbf16>
    %c0_10 = arith.constant 0 : index
    %c0_11 = arith.constant 0 : index
    %12 = vector.load %arg6[%c0_10, %c0_11] : memref<96x32xbf16, #tpu.memory_space<vmem>>, vector<96x32xbf16>
    tpu.vector_store %arg6[%c0_10, %c0_11], %11 {strides = array<i32>} : memref<96x32xbf16, #tpu.memory_space<vmem>>, vector<96x32xbf16>,
    %13 = arith.truncf %10 : vector<96x32xf32> to vector<96x32xbf16>
    %c0_12 = arith.constant 0 : index
    %c0_13 = arith.constant 0 : index
    %14 = vector.load %arg7[%c0_12, %c0_13] : memref<96x32xbf16, #tpu.memory_space<vmem>>, vector<96x32xbf16>
    tpu.vector_store %arg7[%c0_12, %c0_13], %13 {strides = array<i32>} : memref<96x32xbf16, #tpu.memory_space<vmem>>, vector<96x32xbf16>,
    return
  }
  func.func @transform_0(%arg0: i32) -> (i32, i32) {
    %c0_i32 = arith.constant 0 : i32
    %c0_i32_0 = arith.constant 0 : i32
    return %arg0, %c0_i32 : i32, i32
  }
  func.func @transform_1(%arg0: i32) -> (i32, i32) {
    %c0_i32 = arith.constant 0 : i32
    %c0_i32_0 = arith.constant 0 : i32
    %c0_i32_1 = arith.constant 0 : i32
    return %c0_i32, %c0_i32_0 : i32, i32
  }
  func.func @transform_2(%arg0: i32) -> (i32, i32) {
    %c0_i32 = arith.constant 0 : i32
    %c0_i32_0 = arith.constant 0 : i32
    %c0_i32_1 = arith.constant 0 : i32
    return %c0_i32, %c0_i32_0 : i32, i32
  }
  func.func @transform_3(%arg0: i32) -> (i32, i32) {
    %c0_i32 = arith.constant 0 : i32
    %c0_i32_0 = arith.constant 0 : i32
    %c0_i32_1 = arith.constant 0 : i32
    return %c0_i32, %c0_i32_0 : i32, i32
  }
  func.func @transform_4(%arg0: i32) -> (i32, i32) {
    %c0_i32 = arith.constant 0 : i32
    %c0_i32_0 = arith.constant 0 : i32
    %c0_i32_1 = arith.constant 0 : i32
    return %c0_i32, %c0_i32_0 : i32, i32
  }
  func.func @transform_5(%arg0: i32) -> (i32, i32) {
    %c0_i32 = arith.constant 0 : i32
    %c0_i32_0 = arith.constant 0 : i32
    return %arg0, %c0_i32 : i32, i32
  }
  func.func @transform_6(%arg0: i32) -> (i32, i32) {
    %c0_i32 = arith.constant 0 : i32
    %c0_i32_0 = arith.constant 0 : i32
    return %arg0, %c0_i32 : i32, i32
  }
}

</mosaic_0001>

<llo_original>
// kernel: tpu_custom_call.1
$region0: #{tpu_custom_call.1}
  #allocation0 [shape = 'u32[]', space=smem, size = 0x4, offset = 0x4, fixed_abs, tag = 'smem constant byte address 0x4 - core index']
  #allocation1 [shape = 'u32[72,128]{1,0:T(1,128)}', space=vmem, size = 0x9000, scoped, tag = 'internal scratch']
  %s0 = inlined_call_operand.hbm [shape: f32[16,128], index: 0, kind: input, shape index: {}]
  %s1 = inlined_call_operand.hbm [shape: f32[8,128], index: 1, kind: input, shape index: {}]
  %s2 = inlined_call_operand.hbm [shape: f32[16,128], index: 2, kind: output, shape index: {}]
  %s3 = sld [smem:[#allocation0]]
  $region49: #{tpu_custom_call.1} parent=0
    _
  %s5 = ssub.s32 1, %s3
  %s6 = scalar_select 0, %s5, %s3
  $region1: #{tpu_custom_call.1} parent=0
    #allocation2 [shape = 'u8[8192]{0}', space=vmem, size = 0x2000, scoped, tag = 'input window, operand 0']
    #allocation3 [shape = 's32[2]{0}', space=sflag, size = 0x8, scoped, tag = 'scoped memory for tpu_custom_call.1']
    #allocation4 [shape = 's32[2]{0}', space=sflag, size = 0x8, scoped, tag = 'scoped memory for tpu_custom_call.1']
    #allocation5 [shape = 'u8[4096]{0}', space=vmem, size = 0x1000, scoped, tag = 'input window, operand 1, single buffered']
    #allocation6 [shape = 's32[1]{0}', space=sflag, size = 0x4, scoped, tag = 'scoped memory for tpu_custom_call.1']
    #allocation7 [shape = 'u8[8192]{0}', space=vmem, size = 0x2000, scoped, tag = 'output window, operand 0']
    %7 = vsyncpa [#allocation3], 0
    %s8 = scalar_lea.sflag [#allocation3], 1
    %9 = vsyncpa %s8, 0
    %10 = vsyncpa [#allocation6], 0
    %11 = vsyncpa [#allocation4], 0
    %s12 = scalar_lea.sflag [#allocation4], 1
    %13 = vsyncpa %s12, 0
    loop: start=0, step=1, limit=4
    $region2: #{tpu_custom_call.1} parent=1 // loop_pre_header
      _
    $region3: #{tpu_custom_call.1} parent=1 // loop_header
      %s15 = sphi 0, %s19
      %p16 = scmp.ge.s32.totalorder %s15, 4
      %s25 = sphi 0, %s27
      %s28 = sphi 0, %s25
      %s29 = sphi 0, %s28
      %s45 = sphi 0, %s29
      %s49 = sphi 0, %s49
      %s51 = sphi 0, %s49
      %s52 = sphi 0, %s51
      %s66 = sphi 0, %s52
      %s72 = sphi 0, %s74
      %s75 = sphi 0, %s72
      %s76 = sphi 0, %s75
      %s92 = sphi 0, %s76
    $region4: #{tpu_custom_call.1} parent=1 // loop_header_branch
      %18 = sbr.rel (%p16) target = $region8
    $region5: #{tpu_custom_call.1} parent=1 // loop_body
      %s20 = ssub.s32 %s15, 1
      %s21 = ssub.s32 %s15, 2
      %s22 = sadd.s32 %s15, 1
      %s23 = ssub.s32 %s15, %s22
      %p24 = scmp.eq.s32.totalorder %s23, 0
      %s26 = sadd.s32 %s25, 1
      %s27 = scalar_select %p24, %s25, %s26
      %p30 = pneg %p24
      %p31 = scmp.eq.s32.totalorder %s15, 1
      %p32 = por %p30, %p31
      %p33 = scmp.ne.s32.totalorder %s25, %s28
      %p34 = scmp.eq.s32.totalorder %s15, 0
      %p35 = por %p33, %p34
      %p36 = scmp.ne.s32.totalorder %s25, %s28
      %p37 = scmp.eq.s32.totalorder %s20, 1
      %p38 = por %p36, %p37
      %p39 = scmp.ne.s32.totalorder %s28, %s29
      %p40 = scmp.eq.s32.totalorder %s20, 0
      %p41 = por %p39, %p40
      %p42 = scmp.ne.s32.totalorder %s28, %s29
      %p43 = scmp.eq.s32.totalorder %s21, 1
      %p44 = por %p42, %p43
      %p46 = scmp.ne.s32.totalorder %s29, %s45
      %p47 = scmp.eq.s32.totalorder %s21, 0
      %p48 = por %p46, %p47
      %s50 = sadd.s32 %s49, 1
      %p53 = scmp.eq.s32.totalorder %s15, 1
      %p54 = scmp.ne.s32.totalorder %s49, %s51
      %p55 = scmp.eq.s32.totalorder %s15, 0
      %p56 = por %p54, %p55
      %p57 = scmp.ne.s32.totalorder %s49, %s51
      %p58 = scmp.eq.s32.totalorder %s20, 1
      %p59 = por %p57, %p58
      %p60 = scmp.ne.s32.totalorder %s51, %s52
      %p61 = scmp.eq.s32.totalorder %s20, 0
      %p62 = por %p60, %p61
      %p63 = scmp.ne.s32.totalorder %s51, %s52
      %p64 = scmp.eq.s32.totalorder %s21, 1
      %p65 = por %p63, %p64
      %p67 = scmp.ne.s32.totalorder %s52, %s66
      %p68 = scmp.eq.s32.totalorder %s21, 0
      %p69 = por %p67, %p68
      %s70 = ssub.s32 %s15, %s22
      %p71 = scmp.eq.s32.totalorder %s70, 0
      %s73 = sadd.s32 %s72, 1
      %s74 = scalar_select %p71, %s72, %s73
      %p77 = pneg %p71
      %p78 = scmp.eq.s32.totalorder %s15, 1
      %p79 = por %p77, %p78
      %p80 = scmp.ne.s32.totalorder %s72, %s75
      %p81 = scmp.eq.s32.totalorder %s15, 0
      %p82 = por %p80, %p81
      %p83 = scmp.ne.s32.totalorder %s72, %s75
      %p84 = scmp.eq.s32.totalorder %s20, 1
      %p85 = por %p83, %p84
      %p86 = scmp.ne.s32.totalorder %s75, %s76
      %p87 = scmp.eq.s32.totalorder %s20, 0
      %p88 = por %p86, %p87
      %p89 = scmp.ne.s32.totalorder %s75, %s76
      %p90 = scmp.eq.s32.totalorder %s21, 1
      %p91 = por %p89, %p90
      %p93 = scmp.ne.s32.totalorder %s76, %s92
      %p94 = scmp.eq.s32.totalorder %s21, 0
      %p95 = por %p93, %p94
      %p96 = scmp.le.s32.totalorder 1, %s15
      %p97 = scmp.lt.s32.totalorder %s15, 3
      %p98 = pnand %p96, %p97
      %p99 = pneg %p98
      // Predicated region
      $region9: #{tpu_custom_call.1} parent=5 // pred_check
        _
      $region10: #{tpu_custom_call.1} parent=5 // pred_check_branch
        %101 = sbr.rel (%p98) target = $region12
      $region11: #{tpu_custom_call.1} parent=5 // pred_region
        %s102 = ssub.s32 %s15, 1
        // Predicated region
        $region13: #{tpu_custom_call.1} parent=11 // pred_check
          %p103 = pneg %p62
        $region14: #{tpu_custom_call.1} parent=11 // pred_check_branch
          %105 = sbr.rel (%p103) target = $region16
        $region15: #{tpu_custom_call.1} parent=11 // pred_region
          %107 = vsyncadd [#allocation6], 0
          %s109 = sshll.u32 %s1, 4
          %s110 = int_to_ptr.hbm [resolvable:$true] %s109
          %s111 = sshll.u32 [#allocation5], 4
          %s112 = int_to_ptr.vmem [resolvable:$true] %s111
          %114 = dma.hbm_to_vmem [thread:$0]  %s110, 128, %s112, [#allocation6]
        $region16: #{tpu_custom_call.1} parent=11 // pred_fallthru
          _
      $region12: #{tpu_custom_call.1} parent=5 // pred_fallthru
        _
      %p115 = scmp.lt.s32.totalorder %s15, 2
      // Predicated region
      $region17: #{tpu_custom_call.1} parent=5 // pred_check
        %p116 = pneg %p115
      $region18: #{tpu_custom_call.1} parent=5 // pred_check_branch
        %118 = sbr.rel (%p116) target = $region20
      $region19: #{tpu_custom_call.1} parent=5 // pred_region
        // Predicated region
        $region21: #{tpu_custom_call.1} parent=19 // pred_check
          %p119 = pneg %p35
        $region22: #{tpu_custom_call.1} parent=19 // pred_check_branch
          %121 = sbr.rel (%p119) target = $region24
        $region23: #{tpu_custom_call.1} parent=19 // pred_region
          %s122 = sand.u32 %s25, 1
          %s123 = scalar_lea.sflag [#allocation3], %s122
          %s124 = sand.u32 %s25, 1
          %s125 = smul.addr %s124, 8
          %s126 = scalar_lea.vmem [#allocation2], %s125
          %128 = vsyncadd %s123, 0
          %s129 = smul.addr %s15, 8
          %s130 = scalar_lea.hbm %s0, %s129
          %s132 = sshll.u32 %s130, 4
          %s133 = int_to_ptr.hbm [resolvable:$true] %s132
          %s134 = sshll.u32 %s126, 4
          %s135 = int_to_ptr.vmem [resolvable:$true] %s134
          %137 = dma.hbm_to_vmem [thread:$0]  %s133, 128, %s135, %s123
        $region24: #{tpu_custom_call.1} parent=19 // pred_fallthru
          _
      $region20: #{tpu_custom_call.1} parent=5 // pred_fallthru
        _
      %p138 = scmp.le.s32.totalorder 1, %s15
      %p139 = scmp.lt.s32.totalorder %s15, 3
      %p140 = pnand %p138, %p139
      %p141 = pneg %p140
      // Predicated region
      $region25: #{tpu_custom_call.1} parent=5 // pred_check
        _
      $region26: #{tpu_custom_call.1} parent=5 // pred_check_branch
        %143 = sbr.rel (%p140) target = $region28
      $region27: #{tpu_custom_call.1} parent=5 // pred_region
        %s144 = ssub.s32 %s15, 1
        %s145 = sand.u32 %s28, 1
        %s146 = scalar_lea.sflag [#allocation3], %s145
        %s147 = sand.u32 %s28, 1
        %s148 = smul.addr %s147, 8
        %s149 = scalar_lea.vmem [#allocation2], %s148
        // Predicated region
        $region29: #{tpu_custom_call.1} parent=27 // pred_check
          %p150 = pneg %p41
        $region30: #{tpu_custom_call.1} parent=27 // pred_check_branch
          %152 = sbr.rel (%p150) target = $region32
        $region31: #{tpu_custom_call.1} parent=27 // pred_region
          %154 = dma.done %s146, 128
        $region32: #{tpu_custom_call.1} parent=27 // pred_fallthru
          _
        // Predicated region
        $region33: #{tpu_custom_call.1} parent=27 // pred_check
          %p155 = pneg %p62
        $region34: #{tpu_custom_call.1} parent=27 // pred_check_branch
          %157 = sbr.rel (%p155) target = $region36
        $region35: #{tpu_custom_call.1} parent=27 // pred_region
          %159 = dma.done [#allocation6], 128
        $region36: #{tpu_custom_call.1} parent=27 // pred_fallthru
          _
        %s160 = sand.u32 %s28, 1
        %s161 = scalar_lea.sflag [#allocation3], %s160
        %s162 = sand.u32 %s28, 1
        %s163 = smul.addr %s162, 8
        %s164 = scalar_lea.vmem [#allocation2], %s163
        %p165 = pneg %p41
        %p166 = pneg %p38
        %p167 = pneg %p62
        %p168 = pneg %p59
        %p169 = pneg %p88
        %p170 = pneg %p85
        %s171 = sand.u32 %s75, 1
        %s172 = scalar_lea.sflag [#allocation4], %s171
        %s173 = sand.u32 %s75, 1
        %s174 = smul.addr %s173, 8
        %s175 = scalar_lea.vmem [#allocation7], %s174
        %v176 = vld [vmem:[%s149] sm:$0xff]
        %v177 = vld [vmem:[#allocation5] sm:$0xff]
        %v178 = vadd.f32 %v176, %v177
        %179 = vst [vmem:[%s175] sm:$0xff] %v178
        %s180 = sand.u32 %s75, 1
        %s181 = scalar_lea.sflag [#allocation4], %s180
        %s182 = sand.u32 %s75, 1
        %s183 = smul.addr %s182, 8
        %s184 = scalar_lea.vmem [#allocation7], %s183
        // Predicated region
        $region37: #{tpu_custom_call.1} parent=27 // pred_check
          %p185 = pneg %p85
        $region38: #{tpu_custom_call.1} parent=27 // pred_check_branch
          %187 = sbr.rel (%p185) target = $region40
        $region39: #{tpu_custom_call.1} parent=27 // pred_region
          %189 = vsyncadd %s181, 0
          %s190 = smul.addr %s20, 8
          %s191 = scalar_lea.hbm %s2, %s190
          %s193 = sshll.u32 %s184, 4
          %s194 = int_to_ptr.vmem [resolvable:$true] %s193
          %s195 = sshll.u32 %s191, 4
          %s196 = int_to_ptr.hbm [resolvable:$true] %s195
          %198 = dma.vmem_to_hbm [thread:$0]  %s194, 128, %s196, %s181
        $region40: #{tpu_custom_call.1} parent=27 // pred_fallthru
          _
      $region28: #{tpu_custom_call.1} parent=5 // pred_fallthru
        _
      %p199 = scmp.le.s32.totalorder 2, %s15
      // Predicated region
      $region41: #{tpu_custom_call.1} parent=5 // pred_check
        %p200 = pneg %p199
      $region42: #{tpu_custom_call.1} parent=5 // pred_check_branch
        %202 = sbr.rel (%p200) target = $region44
      $region43: #{tpu_custom_call.1} parent=5 // pred_region
        %s203 = ssub.s32 %s15, 2
        // Predicated region
        $region45: #{tpu_custom_call.1} parent=43 // pred_check
          %p204 = pneg %p91
        $region46: #{tpu_custom_call.1} parent=43 // pred_check_branch
          %206 = sbr.rel (%p204) target = $region48
        $region47: #{tpu_custom_call.1} parent=43 // pred_region
          %s207 = sand.u32 %s76, 1
          %s208 = scalar_lea.sflag [#allocation4], %s207
          %s209 = sand.u32 %s76, 1
          %s210 = smul.addr %s209, 8
          %s211 = scalar_lea.vmem [#allocation7], %s210
          %213 = dma.done %s208, 128
        $region48: #{tpu_custom_call.1} parent=43 // pred_fallthru
          _
      $region44: #{tpu_custom_call.1} parent=5 // pred_fallthru
        _
    $region6: #{tpu_custom_call.1} parent=1 // loop_footer
      %s19 = sadd.s32 1, %s15
    $region7: #{tpu_custom_call.1} parent=1 // loop_footer_branch
      %14 = sbr.rel target = $region3
    $region8: #{tpu_custom_call.1} parent=1 // loop_exit
      _
    %214 = vsyncpa [#allocation3], 1
    %s215 = scalar_lea.sflag [#allocation3], 1
    %216 = vsyncpa %s215, 1
    %217 = vsyncpa [#allocation6], 1
    %218 = vsyncpa [#allocation4], 1
    %s219 = scalar_lea.sflag [#allocation4], 1
    %220 = vsyncpa %s219, 1

// kernel: tpu_custom_call.1
$region0: #{tpu_custom_call.1}
  #allocation0 [shape = 'u32[]', space=smem, size = 0x4, offset = 0x4, fixed_abs, tag = 'smem constant byte address 0x4 - core index']
  #allocation1 [shape = 'u32[72,128]{1,0:T(1,128)}', space=vmem, size = 0x9000, scoped, tag = 'internal scratch']
  %s0 = inlined_call_operand.vmem [shape: bf16[192,32], index: 0, kind: input, shape index: {}]
  %s1 = inlined_call_operand.vmem [shape: bf16[32,32], index: 1, kind: input, shape index: {}]
  %s2 = inlined_call_operand.vmem [shape: f32[1,32], index: 2, kind: input, shape index: {}]
  %s3 = inlined_call_operand.vmem [shape: bf16[32,32], index: 3, kind: input, shape index: {}]
  %s4 = inlined_call_operand.vmem [shape: f32[1,32], index: 4, kind: input, shape index: {}]
  %s5 = inlined_call_operand.vmem [shape: bf16[192,32], index: 5, kind: output, shape index: {0}]
  %s6 = inlined_call_operand.vmem [shape: bf16[192,32], index: 6, kind: output, shape index: {1}]
  %7 = xla_tuple %s5, %s6
  %s8 = sld [smem:[#allocation0]]
  $region61: #{tpu_custom_call.1} parent=0
    _
  %s10 = ssub.s32 1, %s8
  %s11 = scalar_select 0, %s10, %s8
  loop: start=0, step=1, limit=4
  $region2: #{tpu_custom_call.1} parent=0 // loop_pre_header
    _
  $region3: #{tpu_custom_call.1} parent=0 // loop_header
    %s13 = sphi 0, %s17
    %p14 = scmp.ge.s32.totalorder %s13, 4
    %s23 = sphi 0, %s25
    %s26 = sphi 0, %s23
    %s27 = sphi 0, %s26
    %s43 = sphi 0, %s27
    %s47 = sphi 0, %s47
    %s49 = sphi 0, %s47
    %s50 = sphi 0, %s49
    %s64 = sphi 0, %s50
    %s68 = sphi 0, %s68
    %s70 = sphi 0, %s68
    %s71 = sphi 0, %s70
    %s85 = sphi 0, %s71
    %s89 = sphi 0, %s89
    %s91 = sphi 0, %s89
    %s92 = sphi 0, %s91
    %s106 = sphi 0, %s92
    %s110 = sphi 0, %s110
    %s112 = sphi 0, %s110
    %s113 = sphi 0, %s112
    %s127 = sphi 0, %s113
    %s133 = sphi 0, %s135
    %s136 = sphi 0, %s133
    %s137 = sphi 0, %s136
    %s153 = sphi 0, %s137
    %s159 = sphi 0, %s161
    %s162 = sphi 0, %s159
    %s163 = sphi 0, %s162
    %s179 = sphi 0, %s163
  $region4: #{tpu_custom_call.1} parent=0 // loop_header_branch
    %16 = sbr.rel (%p14) target = $region8
  $region5: #{tpu_custom_call.1} parent=0 // loop_body
    %s18 = ssub.s32 %s13, 1
    %s19 = ssub.s32 %s13, 2
    %s20 = sadd.s32 %s13, 1
    %s21 = ssub.s32 %s13, %s20
    %p22 = scmp.eq.s32.totalorder %s21, 0
    %s24 = sadd.s32 %s23, 1
    %s25 = scalar_select %p22, %s23, %s24
    %p28 = pneg %p22
    %p29 = scmp.eq.s32.totalorder %s13, 1
    %p30 = por %p28, %p29
    %p31 = scmp.ne.s32.totalorder %s23, %s26
    %p32 = scmp.eq.s32.totalorder %s13, 0
    %p33 = por %p31, %p32
    %p34 = scmp.ne.s32.totalorder %s23, %s26
    %p35 = scmp.eq.s32.totalorder %s18, 1
    %p36 = por %p34, %p35
    %p37 = scmp.ne.s32.totalorder %s26, %s27
    %p38 = scmp.eq.s32.totalorder %s18, 0
    %p39 = por %p37, %p38
    %p40 = scmp.ne.s32.totalorder %s26, %s27
    %p41 = scmp.eq.s32.totalorder %s19, 1
    %p42 = por %p40, %p41
    %p44 = scmp.ne.s32.totalorder %s27, %s43
    %p45 = scmp.eq.s32.totalorder %s19, 0
    %p46 = por %p44, %p45
    %s48 = sadd.s32 %s47, 1
    %p51 = scmp.eq.s32.totalorder %s13, 1
    %p52 = scmp.ne.s32.totalorder %s47, %s49
    %p53 = scmp.eq.s32.totalorder %s13, 0
    %p54 = por %p52, %p53
    %p55 = scmp.ne.s32.totalorder %s47, %s49
    %p56 = scmp.eq.s32.totalorder %s18, 1
    %p57 = por %p55, %p56
    %p58 = scmp.ne.s32.totalorder %s49, %s50
    %p59 = scmp.eq.s32.totalorder %s18, 0
    %p60 = por %p58, %p59
    %p61 = scmp.ne.s32.totalorder %s49, %s50
    %p62 = scmp.eq.s32.totalorder %s19, 1
    %p63 = por %p61, %p62
    %p65 = scmp.ne.s32.totalorder %s50, %s64
    %p66 = scmp.eq.s32.totalorder %s19, 0
    %p67 = por %p65, %p66
    %s69 = sadd.s32 %s68, 1
    %p72 = scmp.eq.s32.totalorder %s13, 1
    %p73 = scmp.ne.s32.totalorder %s68, %s70
    %p74 = scmp.eq.s32.totalorder %s13, 0
    %p75 = por %p73, %p74
    %p76 = scmp.ne.s32.totalorder %s68, %s70
    %p77 = scmp.eq.s32.totalorder %s18, 1
    %p78 = por %p76, %p77
    %p79 = scmp.ne.s32.totalorder %s70, %s71
    %p80 = scmp.eq.s32.totalorder %s18, 0
    %p81 = por %p79, %p80
    %p82 = scmp.ne.s32.totalorder %s70, %s71
    %p83 = scmp.eq.s32.totalorder %s19, 1
    %p84 = por %p82, %p83
    %p86 = scmp.ne.s32.totalorder %s71, %s85
    %p87 = scmp.eq.s32.totalorder %s19, 0
    %p88 = por %p86, %p87
    %s90 = sadd.s32 %s89, 1
    %p93 = scmp.eq.s32.totalorder %s13, 1
    %p94 = scmp.ne.s32.totalorder %s89, %s91
    %p95 = scmp.eq.s32.totalorder %s13, 0
    %p96 = por %p94, %p95
    %p97 = scmp.ne.s32.totalorder %s89, %s91
    %p98 = scmp.eq.s32.totalorder %s18, 1
    %p99 = por %p97, %p98
    %p100 = scmp.ne.s32.totalorder %s91, %s92
    %p101 = scmp.eq.s32.totalorder %s18, 0
    %p102 = por %p100, %p101
    %p103 = scmp.ne.s32.totalorder %s91, %s92
    %p104 = scmp.eq.s32.totalorder %s19, 1
    %p105 = por %p103, %p104
    %p107 = scmp.ne.s32.totalorder %s92, %s106
    %p108 = scmp.eq.s32.totalorder %s19, 0
    %p109 = por %p107, %p108
    %s111 = sadd.s32 %s110, 1
    %p114 = scmp.eq.s32.totalorder %s13, 1
    %p115 = scmp.ne.s32.totalorder %s110, %s112
    %p116 = scmp.eq.s32.totalorder %s13, 0
    %p117 = por %p115, %p116
    %p118 = scmp.ne.s32.totalorder %s110, %s112
    %p119 = scmp.eq.s32.totalorder %s18, 1
    %p120 = por %p118, %p119
    %p121 = scmp.ne.s32.totalorder %s112, %s113
    %p122 = scmp.eq.s32.totalorder %s18, 0
    %p123 = por %p121, %p122
    %p124 = scmp.ne.s32.totalorder %s112, %s113
    %p125 = scmp.eq.s32.totalorder %s19, 1
    %p126 = por %p124, %p125
    %p128 = scmp.ne.s32.totalorder %s113, %s127
    %p129 = scmp.eq.s32.totalorder %s19, 0
    %p130 = por %p128, %p129
    %s131 = ssub.s32 %s13, %s20
    %p132 = scmp.eq.s32.totalorder %s131, 0
    %s134 = sadd.s32 %s133, 1
    %s135 = scalar_select %p132, %s133, %s134
    %p138 = pneg %p132
    %p139 = scmp.eq.s32.totalorder %s13, 1
    %p140 = por %p138, %p139
    %p141 = scmp.ne.s32.totalorder %s133, %s136
    %p142 = scmp.eq.s32.totalorder %s13, 0
    %p143 = por %p141, %p142
    %p144 = scmp.ne.s32.totalorder %s133, %s136
    %p145 = scmp.eq.s32.totalorder %s18, 1
    %p146 = por %p144, %p145
    %p147 = scmp.ne.s32.totalorder %s136, %s137
    %p148 = scmp.eq.s32.totalorder %s18, 0
    %p149 = por %p147, %p148
    %p150 = scmp.ne.s32.totalorder %s136, %s137
    %p151 = scmp.eq.s32.totalorder %s19, 1
    %p152 = por %p150, %p151
    %p154 = scmp.ne.s32.totalorder %s137, %s153
    %p155 = scmp.eq.s32.totalorder %s19, 0
    %p156 = por %p154, %p155
    %s157 = ssub.s32 %s13, %s20
    %p158 = scmp.eq.s32.totalorder %s157, 0
    %s160 = sadd.s32 %s159, 1
    %s161 = scalar_select %p158, %s159, %s160
    %p164 = pneg %p158
    %p165 = scmp.eq.s32.totalorder %s13, 1
    %p166 = por %p164, %p165
    %p167 = scmp.ne.s32.totalorder %s159, %s162
    %p168 = scmp.eq.s32.totalorder %s13, 0
    %p169 = por %p167, %p168
    %p170 = scmp.ne.s32.totalorder %s159, %s162
    %p171 = scmp.eq.s32.totalorder %s18, 1
    %p172 = por %p170, %p171
    %p173 = scmp.ne.s32.totalorder %s162, %s163
    %p174 = scmp.eq.s32.totalorder %s18, 0
    %p175 = por %p173, %p174
    %p176 = scmp.ne.s32.totalorder %s162, %s163
    %p177 = scmp.eq.s32.totalorder %s19, 1
    %p178 = por %p176, %p177
    %p180 = scmp.ne.s32.totalorder %s163, %s179
    %p181 = scmp.eq.s32.totalorder %s19, 0
    %p182 = por %p180, %p181
    %p183 = scmp.le.s32.totalorder 1, %s13
    %p184 = scmp.lt.s32.totalorder %s13, 3
    %p185 = pnand %p183, %p184
    %p186 = pneg %p185
    // Predicated region
    $region9: #{tpu_custom_call.1} parent=5 // pred_check
      _
    $region10: #{tpu_custom_call.1} parent=5 // pred_check_branch
      %188 = sbr.rel (%p185) target = $region12
    $region11: #{tpu_custom_call.1} parent=5 // pred_region
      %s189 = ssub.s32 %s13, 1
      // Predicated region
      $region13: #{tpu_custom_call.1} parent=11 // pred_check
        %p190 = pneg %p60
      $region14: #{tpu_custom_call.1} parent=11 // pred_check_branch
        %192 = sbr.rel (%p190) target = $region16
      $region15: #{tpu_custom_call.1} parent=11 // pred_region
        _
      $region16: #{tpu_custom_call.1} parent=11 // pred_fallthru
        _
      // Predicated region
      $region17: #{tpu_custom_call.1} parent=11 // pred_check
        %p193 = pneg %p81
      $region18: #{tpu_custom_call.1} parent=11 // pred_check_branch
        %195 = sbr.rel (%p193) target = $region20
      $region19: #{tpu_custom_call.1} parent=11 // pred_region
        _
      $region20: #{tpu_custom_call.1} parent=11 // pred_fallthru
        _
      // Predicated region
      $region21: #{tpu_custom_call.1} parent=11 // pred_check
        %p196 = pneg %p102
      $region22: #{tpu_custom_call.1} parent=11 // pred_check_branch
        %198 = sbr.rel (%p196) target = $region24
      $region23: #{tpu_custom_call.1} parent=11 // pred_region
        _
      $region24: #{tpu_custom_call.1} parent=11 // pred_fallthru
        _
      // Predicated region
      $region25: #{tpu_custom_call.1} parent=11 // pred_check
        %p199 = pneg %p123
      $region26: #{tpu_custom_call.1} parent=11 // pred_check_branch
        %201 = sbr.rel (%p199) target = $region28
      $region27: #{tpu_custom_call.1} parent=11 // pred_region
        _
      $region28: #{tpu_custom_call.1} parent=11 // pred_fallthru
        _
    $region12: #{tpu_custom_call.1} parent=5 // pred_fallthru
      _
    %p202 = scmp.lt.s32.totalorder %s13, 2
    // Predicated region
    $region29: #{tpu_custom_call.1} parent=5 // pred_check
      %p203 = pneg %p202
    $region30: #{tpu_custom_call.1} parent=5 // pred_check_branch
      %205 = sbr.rel (%p203) target = $region32
    $region31: #{tpu_custom_call.1} parent=5 // pred_region
      // Predicated region
      $region33: #{tpu_custom_call.1} parent=31 // pred_check
        %p206 = pneg %p33
      $region34: #{tpu_custom_call.1} parent=31 // pred_check_branch
        %208 = sbr.rel (%p206) target = $region36
      $region35: #{tpu_custom_call.1} parent=31 // pred_region
        %s209 = smul.u32 12, %s13
        %p210 = scmp.lt.s32.totalorder %s209, 23
        %s211 = scalar_select %p210, %s209, 23
        %s212 = smul.addr %s211, 4
        %s213 = scalar_lea.vmem %s0, %s212
        %s214 = smul.u32 12, %s13
      $region36: #{tpu_custom_call.1} parent=31 // pred_fallthru
        _
    $region32: #{tpu_custom_call.1} parent=5 // pred_fallthru
      _
    %p215 = scmp.le.s32.totalorder 1, %s13
    %p216 = scmp.lt.s32.totalorder %s13, 3
    %p217 = pnand %p215, %p216
    %p218 = pneg %p217
    // Predicated region
    $region37: #{tpu_custom_call.1} parent=5 // pred_check
      _
    $region38: #{tpu_custom_call.1} parent=5 // pred_check_branch
      %220 = sbr.rel (%p217) target = $region40
    $region39: #{tpu_custom_call.1} parent=5 // pred_region
      %s221 = ssub.s32 %s13, 1
      %s222 = smul.u32 12, %s18
      %p223 = scmp.lt.s32.totalorder %s222, 23
      %s224 = scalar_select %p223, %s222, 23
      %s225 = smul.addr %s224, 4
      %s226 = scalar_lea.vmem %s0, %s225
      %p227 = pneg %p39
      %p228 = pneg %p36
      %p229 = pneg %p60
      %p230 = pneg %p57
      %p231 = pneg %p81
      %p232 = pneg %p78
      %p233 = pneg %p102
      %p234 = pneg %p99
      %p235 = pneg %p123
      %p236 = pneg %p120
      %p237 = pneg %p149
      %p238 = pneg %p146
      %s239 = smul.u32 12, %s18
      %p240 = scmp.lt.s32.totalorder %s239, 23
      %s241 = scalar_select %p240, %s239, 23
      %s242 = smul.addr %s241, 4
      %s243 = scalar_lea.vmem %s5, %s242
      %p244 = pneg %p175
      %p245 = pneg %p172
      %s246 = smul.u32 12, %s18
      %p247 = scmp.lt.s32.totalorder %s246, 23
      %s248 = scalar_select %p247, %s246, 23
      %s249 = smul.addr %s248, 4
      %s250 = scalar_lea.vmem %s6, %s249
      %s251 = smul.u32 12, %s18
      %p252 = scmp.lt.s32.totalorder %s251, 23
      %s253 = scalar_select %p252, %s251, 23
      %s254 = smul.addr %s253, 4
      %s255 = scalar_lea.vmem %s0, %s254
      %s256 = smul.u32 12, %s18
      %s257 = smul.u32 12, %s18
      %p258 = scmp.lt.s32.totalorder %s257, 23
      %s259 = scalar_select %p258, %s257, 23
      %s260 = smul.addr %s259, 4
      %s261 = scalar_lea.vmem %s5, %s260
      %s262 = smul.u32 12, %s18
      %s263 = smul.u32 12, %s18
      %p264 = scmp.lt.s32.totalorder %s263, 23
      %s265 = scalar_select %p264, %s263, 23
      %s266 = smul.addr %s265, 4
      %s267 = scalar_lea.vmem %s6, %s266
      %s268 = smul.u32 12, %s18
      %v270 = vld [vmem:[%s255] sm:$0xf]
      %v271 = vld [vmem:[%s255 + $0x4] sm:$0xf]
      %v272 = vld [vmem:[%s255 + $0x8] sm:$0xf]
      %v273 = vld [vmem:[%s255 + $0xc] sm:$0xf]
      %v274 = vld [vmem:[%s255 + $0x10] sm:$0xf]
      %v275 = vld [vmem:[%s255 + $0x14] sm:$0xf]
      %v276 = vld [vmem:[%s255 + $0x18] sm:$0xf]
      %v277 = vld [vmem:[%s255 + $0x1c] sm:$0xf]
      %v278 = vld [vmem:[%s255 + $0x20] sm:$0xf]
      %v279 = vld [vmem:[%s255 + $0x24] sm:$0xf]
      %v280 = vld [vmem:[%s255 + $0x28] sm:$0xf]
      %v281 = vld [vmem:[%s255 + $0x2c] sm:$0xf]
      %v282 = vld [vmem:[%s1] sm:$0xf]
      %v283 = vld [vmem:[%s1 + $0x4] sm:$0xf]
      %v284 = vld [vmem:[%s1 + $0x8] sm:$0xf]
      %v285 = vld [vmem:[%s1 + $0xc] sm:$0xf]
      %v286 = vld [vmem:[%s2] sm:$0x1]
      %v288 = vperm.slane %v286, 0
      %v302 = vunpack.c.l.b16 %v270
      %v303 = vunpack.c.l.b16 %v271
      %v304 = vunpack.c.l.b16 %v272
      %v305 = vunpack.c.l.b16 %v273
      %v306 = vunpack.c.l.b16 %v274
      %v307 = vunpack.c.l.b16 %v275
      %v308 = vunpack.c.l.b16 %v276
      %v309 = vunpack.c.l.b16 %v277
      %v310 = vunpack.c.l.b16 %v278
      %v311 = vunpack.c.l.b16 %v279
      %v312 = vunpack.c.l.b16 %v280
      %v313 = vunpack.c.l.b16 %v281
      %v314 = vpack.c.b16 %v303, %v302
      %v315 = vpack.c.b16 %v305, %v304
      %v316 = vpack.c.b16 %v307, %v306
      %v317 = vpack.c.b16 %v309, %v308
      %v318 = vpack.c.b16 %v311, %v310
      %v319 = vpack.c.b16 %v313, %v312
      %v324 = vunpack.c.l.b16 %v282
      %v325 = vunpack.c.l.b16 %v283
      %v326 = vunpack.c.l.b16 %v284
      %v327 = vunpack.c.l.b16 %v285
      %v328 = vpack.c.b16 %v325, %v324
      %v329 = vpack.c.b16 %v327, %v326
      %vm332 = vcmask 261120
      %v334 = vsel %vm332, %v314, 0
      %v337 = vsel %vm332, %v315, 0
      %v340 = vsel %vm332, %v316, 0
      %v343 = vsel %vm332, %v317, 0
      %v346 = vsel %vm332, %v318, 0
      %v349 = vsel %vm332, %v319, 0
      %351 = vmatpush.bf16.msra.mxu0 0
      %352 = vmatpush.bf16.msra.mxu0 0
      %353 = vmatpush.bf16.msra.mxu0 0
      %354 = vmatpush.bf16.msra.mxu0 0
      %355 = vmatpush.bf16.msra.mxu0 0
      %356 = vmatpush.bf16.msra.mxu0 0
      %357 = vmatpush.bf16.msra.mxu0 %v329
      %358 = vmatpush.bf16.msra.mxu0 %v328
      %359 = vmatmul.bf16.gmra.mxu0 %v334
      %v360 = vpop.f32.mrf.mxu0
      %v361 = vadd.f32 %v288, %v360
      %v362 = vpop.f32.mrf.mxu0
      %v363 = vadd.f32 %v288, %v362
      %364 = vmatmul.bf16.gmra.mxu0 %v337
      %v365 = vpop.f32.mrf.mxu0
      %v366 = vadd.f32 %v288, %v365
      %v367 = vpop.f32.mrf.mxu0
      %v368 = vadd.f32 %v288, %v367
      %369 = vmatmul.bf16.gmra.mxu0 %v340
      %v370 = vpop.f32.mrf.mxu0
      %v371 = vadd.f32 %v288, %v370
      %v372 = vpop.f32.mrf.mxu0
      %v373 = vadd.f32 %v288, %v372
      %374 = vmatmul.bf16.gmra.mxu0 %v343
      %v375 = vpop.f32.mrf.mxu0
      %v376 = vadd.f32 %v288, %v375
      %v377 = vpop.f32.mrf.mxu0
      %v378 = vadd.f32 %v288, %v377
      %379 = vmatmul.bf16.gmra.mxu0 %v346
      %v380 = vpop.f32.mrf.mxu0
      %v381 = vadd.f32 %v288, %v380
      %v382 = vpop.f32.mrf.mxu0
      %v383 = vadd.f32 %v288, %v382
      %384 = vmatmul.bf16.gmra.mxu0 %v349
      %v385 = vpop.f32.mrf.mxu0
      %v386 = vadd.f32 %v288, %v385
      %v387 = vpop.f32.mrf.mxu0
      %v388 = vadd.f32 %v288, %v387
      %389 = vdwg.mxu0
      %v390 = vld [vmem:[%s3] sm:$0xf]
      %v391 = vld [vmem:[%s3 + $0x4] sm:$0xf]
      %v392 = vld [vmem:[%s3 + $0x8] sm:$0xf]
      %v393 = vld [vmem:[%s3 + $0xc] sm:$0xf]
      %v394 = vld [vmem:[%s4] sm:$0x1]
      %v396 = vperm.slane %v394, 0
      %v402 = vunpack.c.l.b16 %v390
      %v403 = vunpack.c.l.b16 %v391
      %v404 = vunpack.c.l.b16 %v392
      %v405 = vunpack.c.l.b16 %v393
      %v406 = vpack.c.b16 %v403, %v402
      %v407 = vpack.c.b16 %v405, %v404
      %410 = vmatpush.bf16.msra.mxu0 0
      %411 = vmatpush.bf16.msra.mxu0 0
      %412 = vmatpush.bf16.msra.mxu0 0
      %413 = vmatpush.bf16.msra.mxu0 0
      %414 = vmatpush.bf16.msra.mxu0 0
      %415 = vmatpush.bf16.msra.mxu0 0
      %416 = vmatpush.bf16.msra.mxu0 %v407
      %417 = vmatpush.bf16.msra.mxu0 %v406
      %418 = vmatmul.bf16.gmra.mxu0 %v334
      %v419 = vpop.f32.mrf.mxu0
      %v420 = vadd.f32 %v396, %v419
      %v421 = vpop.f32.mrf.mxu0
      %v422 = vadd.f32 %v396, %v421
      %423 = vmatmul.bf16.gmra.mxu0 %v337
      %v424 = vpop.f32.mrf.mxu0
      %v425 = vadd.f32 %v396, %v424
      %v426 = vpop.f32.mrf.mxu0
      %v427 = vadd.f32 %v396, %v426
      %428 = vmatmul.bf16.gmra.mxu0 %v340
      %v429 = vpop.f32.mrf.mxu0
      %v430 = vadd.f32 %v396, %v429
      %v431 = vpop.f32.mrf.mxu0
      %v432 = vadd.f32 %v396, %v431
      %433 = vmatmul.bf16.gmra.mxu0 %v343
      %v434 = vpop.f32.mrf.mxu0
      %v435 = vadd.f32 %v396, %v434
      %v436 = vpop.f32.mrf.mxu0
      %v437 = vadd.f32 %v396, %v436
      %438 = vmatmul.bf16.gmra.mxu0 %v346
      %v439 = vpop.f32.mrf.mxu0
      %v440 = vadd.f32 %v396, %v439
      %v441 = vpop.f32.mrf.mxu0
      %v442 = vadd.f32 %v396, %v441
      %443 = vmatmul.bf16.gmra.mxu0 %v349
      %v444 = vpop.f32.mrf.mxu0
      %v445 = vadd.f32 %v396, %v444
      %v446 = vpop.f32.mrf.mxu0
      %v447 = vadd.f32 %v396, %v446
      %448 = vdwg.mxu0
      %v449 = vpack.c.bf16 %v361, %v361
      %v450 = vpack.c.bf16 %v363, %v363
      %v451 = vpack.c.bf16 %v366, %v366
      %v452 = vpack.c.bf16 %v368, %v368
      %v453 = vpack.c.bf16 %v371, %v371
      %v454 = vpack.c.bf16 %v373, %v373
      %v455 = vpack.c.bf16 %v376, %v376
      %v456 = vpack.c.bf16 %v378, %v378
      %v457 = vpack.c.bf16 %v381, %v381
      %v458 = vpack.c.bf16 %v383, %v383
      %v459 = vpack.c.bf16 %v386, %v386
      %v460 = vpack.c.bf16 %v388, %v388
      %vm461 = vcmask 257024
      %462 = vst.msk [vmem:[%s261] sm:$0xf] %vm461, %v449
      %463 = vst.msk [vmem:[%s261 + $0x4] sm:$0xf] %vm461, %v450
      %464 = vst.msk [vmem:[%s261 + $0x8] sm:$0xf] %vm461, %v451
      %465 = vst.msk [vmem:[%s261 + $0xc] sm:$0xf] %vm461, %v452
      %466 = vst.msk [vmem:[%s261 + $0x10] sm:$0xf] %vm461, %v453
      %467 = vst.msk [vmem:[%s261 + $0x14] sm:$0xf] %vm461, %v454
      %468 = vst.msk [vmem:[%s261 + $0x18] sm:$0xf] %vm461, %v455
      %469 = vst.msk [vmem:[%s261 + $0x1c] sm:$0xf] %vm461, %v456
      %470 = vst.msk [vmem:[%s261 + $0x20] sm:$0xf] %vm461, %v457
      %471 = vst.msk [vmem:[%s261 + $0x24] sm:$0xf] %vm461, %v458
      %472 = vst.msk [vmem:[%s261 + $0x28] sm:$0xf] %vm461, %v459
      %473 = vst.msk [vmem:[%s261 + $0x2c] sm:$0xf] %vm461, %v460
      %v474 = vpack.c.bf16 %v420, %v420
      %v475 = vpack.c.bf16 %v422, %v422
      %v476 = vpack.c.bf16 %v425, %v425
      %v477 = vpack.c.bf16 %v427, %v427
      %v478 = vpack.c.bf16 %v430, %v430
      %v479 = vpack.c.bf16 %v432, %v432
      %v480 = vpack.c.bf16 %v435, %v435
      %v481 = vpack.c.bf16 %v437, %v437
      %v482 = vpack.c.bf16 %v440, %v440
      %v483 = vpack.c.bf16 %v442, %v442
      %v484 = vpack.c.bf16 %v445, %v445
      %v485 = vpack.c.bf16 %v447, %v447
      %486 = vst.msk [vmem:[%s267] sm:$0xf] %vm461, %v474
      %487 = vst.msk [vmem:[%s267 + $0x4] sm:$0xf] %vm461, %v475
      %488 = vst.msk [vmem:[%s267 + $0x8] sm:$0xf] %vm461, %v476
      %489 = vst.msk [vmem:[%s267 + $0xc] sm:$0xf] %vm461, %v477
      %490 = vst.msk [vmem:[%s267 + $0x10] sm:$0xf] %vm461, %v478
      %491 = vst.msk [vmem:[%s267 + $0x14] sm:$0xf] %vm461, %v479
      %492 = vst.msk [vmem:[%s267 + $0x18] sm:$0xf] %vm461, %v480
      %493 = vst.msk [vmem:[%s267 + $0x1c] sm:$0xf] %vm461, %v481
      %494 = vst.msk [vmem:[%s267 + $0x20] sm:$0xf] %vm461, %v482
      %495 = vst.msk [vmem:[%s267 + $0x24] sm:$0xf] %vm461, %v483
      %496 = vst.msk [vmem:[%s267 + $0x28] sm:$0xf] %vm461, %v484
      %497 = vst.msk [vmem:[%s267 + $0x2c] sm:$0xf] %vm461, %v485
      %s498 = smul.u32 12, %s18
      %p499 = scmp.lt.s32.totalorder %s498, 23
      %s500 = scalar_select %p499, %s498, 23
      %s501 = smul.addr %s500, 4
      %s502 = scalar_lea.vmem %s5, %s501
      %s503 = smul.u32 12, %s18
      %p504 = scmp.lt.s32.totalorder %s503, 23
      %s505 = scalar_select %p504, %s503, 23
      %s506 = smul.addr %s505, 4
      %s507 = scalar_lea.vmem %s6, %s506
      // Predicated region
      $region41: #{tpu_custom_call.1} parent=39 // pred_check
        %p508 = pneg %p146
      $region42: #{tpu_custom_call.1} parent=39 // pred_check_branch
        %510 = sbr.rel (%p508) target = $region44
      $region43: #{tpu_custom_call.1} parent=39 // pred_region
        %s511 = smul.u32 12, %s18
      $region44: #{tpu_custom_call.1} parent=39 // pred_fallthru
        _
      // Predicated region
      $region45: #{tpu_custom_call.1} parent=39 // pred_check
        %p512 = pneg %p172
      $region46: #{tpu_custom_call.1} parent=39 // pred_check_branch
        %514 = sbr.rel (%p512) target = $region48
      $region47: #{tpu_custom_call.1} parent=39 // pred_region
        %s515 = smul.u32 12, %s18
      $region48: #{tpu_custom_call.1} parent=39 // pred_fallthru
        _
    $region40: #{tpu_custom_call.1} parent=5 // pred_fallthru
      _
    %p516 = scmp.le.s32.totalorder 2, %s13
    // Predicated region
    $region49: #{tpu_custom_call.1} parent=5 // pred_check
      %p517 = pneg %p516
    $region50: #{tpu_custom_call.1} parent=5 // pred_check_branch
      %519 = sbr.rel (%p517) target = $region52
    $region51: #{tpu_custom_call.1} parent=5 // pred_region
      %s520 = ssub.s32 %s13, 2
      // Predicated region
      $region53: #{tpu_custom_call.1} parent=51 // pred_check
        %p521 = pneg %p152
      $region54: #{tpu_custom_call.1} parent=51 // pred_check_branch
        %523 = sbr.rel (%p521) target = $region56
      $region55: #{tpu_custom_call.1} parent=51 // pred_region
        %s524 = smul.u32 12, %s19
        %p525 = scmp.lt.s32.totalorder %s524, 23
        %s526 = scalar_select %p525, %s524, 23
        %s527 = smul.addr %s526, 4
        %s528 = scalar_lea.vmem %s5, %s527
      $region56: #{tpu_custom_call.1} parent=51 // pred_fallthru
        _
      // Predicated region
      $region57: #{tpu_custom_call.1} parent=51 // pred_check
        %p529 = pneg %p178
      $region58: #{tpu_custom_call.1} parent=51 // pred_check_branch
        %531 = sbr.rel (%p529) target = $region60
      $region59: #{tpu_custom_call.1} parent=51 // pred_region
        %s532 = smul.u32 12, %s19
        %p533 = scmp.lt.s32.totalorder %s532, 23
        %s534 = scalar_select %p533, %s532, 23
        %s535 = smul.addr %s534, 4
        %s536 = scalar_lea.vmem %s6, %s535
      $region60: #{tpu_custom_call.1} parent=51 // pred_fallthru
        _
    $region52: #{tpu_custom_call.1} parent=5 // pred_fallthru
      _
  $region6: #{tpu_custom_call.1} parent=0 // loop_footer
    %s17 = sadd.s32 1, %s13
  $region7: #{tpu_custom_call.1} parent=0 // loop_footer_branch
    %12 = sbr.rel target = $region3
  $region8: #{tpu_custom_call.1} parent=0 // loop_exit
    _

</llo_original>
